<compile_context>
chip_gen: v7x
topology: tpu7x:2x2x1
jax: 0.10.0
libtpu: 0.0.40
codegen_flags: <defaults>
</compile_context>

<pallas_src>
import functools

import jax
import jax.numpy as jnp
from jax.experimental import pallas as pl
from jax.experimental.pallas import tpu as pltpu


# ----------------------------------------------------------------------------
# helpers
# ----------------------------------------------------------------------------
def _round_up(x, m):
    return ((x + m - 1) // m) * m


def _pick_tile(n, cap):
    for t in (512, 256, 128, 64, 32, 16, 8):
        if t <= cap and n % t == 0:
            return t
    return n


_VMEM_LIMIT = 32 * 1024 * 1024  # safe on v5e/v6e/v7x; tiles below are sized well under it


# ----------------------------------------------------------------------------
# Kernel 1: fused offset+mask convolution (matmul + bias + selective sigmoid)
# ----------------------------------------------------------------------------
def _offset_mask_kernel(p_ref, w_ref, b_ref, o_ref, *, sig_start):
    # p_ref: (1, TM, K*C1) bf16    w_ref: (K*C1, CPAD) bf16
    # b_ref: (1, CPAD) f32         o_ref: (1, TM, CPAD) f32
    acc = jnp.dot(p_ref[0], w_ref[...], preferred_element_type=jnp.float32)
    acc = acc + b_ref[...]
    col = jax.lax.broadcasted_iota(jnp.int32, acc.shape, 1)
    # columns [0, sig_start): raw offsets; columns [sig_start, ...): sigmoid (mask + pad)
    o_ref[0] = jnp.where(col >= sig_start, jax.nn.sigmoid(acc), acc)


def fused_offset_mask_conv(patches_bf16, w_cat_bf16, b_cat, *, sig_start):
    """patches: (B, P, K*C1) bf16; w_cat: (K*C1, CPAD) bf16; b_cat: (CPAD,) f32."""
    B, P, KC1 = patches_bf16.shape
    CPAD = w_cat_bf16.shape[1]
    TM = _pick_tile(P, 512)
    kern = functools.partial(_offset_mask_kernel, sig_start=sig_start)
    flops = 2 * B * P * KC1 * CPAD
    bytes_accessed = (B * P * KC1 * 2 + KC1 * CPAD * 2 + B * P * CPAD * 4 + CPAD * 4)
    return pl.pallas_call(
        kern,
        out_shape=jax.ShapeDtypeStruct((B, P, CPAD), jnp.float32),
        grid_spec=pltpu.PrefetchScalarGridSpec(
            num_scalar_prefetch=0,
            grid=(B, P // TM),
            in_specs=[
                pl.BlockSpec((1, TM, KC1), lambda b, t: (b, t, 0)),
                pl.BlockSpec((KC1, CPAD), lambda b, t: (0, 0)),   # weight stays resident
                pl.BlockSpec((1, CPAD), lambda b, t: (0, 0)),
            ],
            out_specs=pl.BlockSpec((1, TM, CPAD), lambda b, t: (b, t, 0)),
        ),
        compiler_params=pltpu.CompilerParams(
            dimension_semantics=("parallel", "parallel"),
            vmem_limit_bytes=_VMEM_LIMIT,
        ),
        cost_estimate=pl.CostEstimate(
            flops=flops, transcendentals=B * P * CPAD, bytes_accessed=bytes_accessed),
    )(patches_bf16, w_cat_bf16, b_cat.reshape(1, CPAD))


# ----------------------------------------------------------------------------
# Kernel 2: modulated deformable conv with the 1x1 conv fused into the epilogue
# ----------------------------------------------------------------------------
def _deform_1x1_kernel(x_ref, om_ref, wf_ref, wom_ref, b_ref, o_ref, *,
                       H, W, Hout, Wout, kh, kw, stride, pad, dil, K, TM):
    HW = H * W
    t = pl.program_id(1)

    x = x_ref[0]          # (HW, C1)   bf16, channels-last flattened image
    om = om_ref[0]        # (TM, CPAD) f32, cols [0:K]=dy, [K:2K]=dx, [2K:3K]=mask

    # source-pixel index grids (built once, reused across taps)
    hw_iota = jax.lax.broadcasted_iota(jnp.int32, (TM, HW), 1)
    h_grid = hw_iota // W
    w_grid = hw_iota - h_grid * W

    # output-pixel coordinates for this P-tile
    p_idx = t * TM + jax.lax.broadcasted_iota(jnp.int32, (TM, 1), 0)
    ho = p_idx // Wout
    wo = p_idx - ho * Wout
    base_y = (ho * stride - pad).astype(jnp.float32)
    base_x = (wo * stride - pad).astype(jnp.float32)

    # 1x1-conv contribution of the offset/mask channels (lane-dense 128x128 matmul)
    acc = jnp.dot(om, wom_ref[...], preferred_element_type=jnp.float32)   # (TM, C2P)

    for k in range(K):
        ki, kj = k // kw, k % kw
        dy = om[:, k:k + 1]                  # (TM, 1)
        dx = om[:, K + k:K + k + 1]
        mk = om[:, 2 * K + k:2 * K + k + 1]

        py = base_y + float(ki * dil) + dy
        px = base_x + float(kj * dil) + dx
        h0f = jnp.floor(py)
        w0f = jnp.floor(px)
        lh = py - h0f
        lw = px - w0f
        h0 = h0f.astype(jnp.int32)
        w0 = w0f.astype(jnp.int32)

        # factored one-hot bilinear matrix; modulation folded into the row weights.
        # out-of-bounds corners never match an index -> exact zero padding.
        wh0 = (1.0 - lh) * mk
        wh1 = lh * mk
        row_sel = (jnp.where(h_grid == h0, wh0, 0.0)
                   + jnp.where(h_grid == h0 + 1, wh1, 0.0))          # (TM, HW)
        col_sel = (jnp.where(w_grid == w0, 1.0 - lw, 0.0)
                   + jnp.where(w_grid == w0 + 1, lw, 0.0))           # (TM, HW)
        bil = (row_sel * col_sel).astype(jnp.bfloat16)

        # sampling on the MXU, then the fused (deform ∘ 1x1) weight with N = C2P lanes
        samp = jnp.dot(bil, x, preferred_element_type=jnp.float32)   # (TM, C1)
        acc = acc + jnp.dot(samp.astype(jnp.bfloat16), wf_ref[k],
                            preferred_element_type=jnp.float32)      # (TM, C2P)

    o_ref[0] = acc + b_ref[...]


def deform_1x1_fused(x_flat_bf16, om, w_fused_bf16, w_om, b_tot, *,
                     H, W, Hout, Wout, kh, kw, stride, pad, dil):
    """x_flat: (B, HW, C1) bf16; om: (B, P, CPAD) f32; w_fused: (K, C1, C2P) bf16;
    w_om: (CPAD, C2P) f32; b_tot: (C2P,) f32  ->  (B, P, C2P) f32."""
    B, HW, C1 = x_flat_bf16.shape
    K = kh * kw
    P = Hout * Wout
    CPAD = om.shape[2]
    C2P = w_fused_bf16.shape[2]
    TM = _pick_tile(P, 128)      # bounds (TM, HW) temporaries for v7x's smaller VMEM
    kern = functools.partial(_deform_1x1_kernel, H=H, W=W, Hout=Hout, Wout=Wout,
                             kh=kh, kw=kw, stride=stride, pad=pad, dil=dil, K=K, TM=TM)
    flops = B * (K * (2 * P * HW * C1 + 2 * P * C1 * C2P) + 2 * P * CPAD * C2P)
    bytes_accessed = (B * HW * C1 * 2 + B * P * CPAD * 4 + B * P * C2P * 4
                      + K * C1 * C2P * 2 + CPAD * C2P * 4 + C2P * 4)
    return pl.pallas_call(
        kern,
        out_shape=jax.ShapeDtypeStruct((B, P, C2P), jnp.float32),
        grid_spec=pltpu.PrefetchScalarGridSpec(
            num_scalar_prefetch=0,
            grid=(B, P // TM),
            in_specs=[
                pl.BlockSpec((1, HW, C1), lambda b, t: (b, 0, 0)),     # x stays resident over t
                pl.BlockSpec((1, TM, CPAD), lambda b, t: (b, t, 0)),
                pl.BlockSpec((K, C1, C2P), lambda b, t: (0, 0, 0)),
                pl.BlockSpec((CPAD, C2P), lambda b, t: (0, 0)),
                pl.BlockSpec((1, C2P), lambda b, t: (0, 0)),
            ],
            out_specs=pl.BlockSpec((1, TM, C2P), lambda b, t: (b, t, 0)),
        ),
        compiler_params=pltpu.CompilerParams(
            dimension_semantics=("parallel", "parallel"),
            vmem_limit_bytes=_VMEM_LIMIT,
        ),
        cost_estimate=pl.CostEstimate(flops=flops, transcendentals=0,
                                      bytes_accessed=bytes_accessed),
    )(x_flat_bf16, om, w_fused_bf16, w_om, b_tot.reshape(1, C2P))


# ----------------------------------------------------------------------------
# Plain-JAX glue
# ----------------------------------------------------------------------------
def im2col_nchw(x, kh, kw, stride, pad, dil):
    """x: (B, C, H, W) -> patches (B, Hout*Wout, kh*kw*C) with column = k*C + c."""
    B, C, H, W = x.shape
    Hout = (H + 2 * pad - dil * (kh - 1) - 1) // stride + 1
    Wout = (W + 2 * pad - dil * (kw - 1) - 1) // stride + 1
    xp = jnp.pad(x, ((0, 0), (0, 0), (pad, pad), (pad, pad)))
    cols = []
    for i in range(kh):
        for j in range(kw):
            sl = xp[:, :,
                    i * dil: i * dil + stride * (Hout - 1) + 1: stride,
                    j * dil: j * dil + stride * (Wout - 1) + 1: stride]
            cols.append(sl)                        # (B, C, Hout, Wout)
    patches = jnp.stack(cols, axis=1)              # (B, K, C, Hout, Wout)
    patches = patches.transpose(0, 3, 4, 1, 2).reshape(B, Hout * Wout, kh * kw * C)
    return patches, Hout, Wout


def make_params(key, c1, c2, kh, kw):
    K = kh * kw
    offset_c2 = 2 * K          # offset_g = 1
    mask_c2 = K
    ks = jax.random.split(key, 8)
    p = {}
    # offset conv: weight is zero-initialized in the module; bias is kept
    p["w_off"] = jnp.zeros((offset_c2, c1, kh, kw), jnp.float32)
    p["b_off"] = 0.3 * jax.random.normal(ks[0], (offset_c2,), jnp.float32)
    # mask conv
    p["w_msk"] = 0.1 * jax.random.normal(ks[1], (mask_c2, c1, kh, kw), jnp.float32)
    p["b_msk"] = 0.1 * jax.random.normal(ks[2], (mask_c2,), jnp.float32)
    # deformable conv (groups = 1)
    p["w_def"] = 0.2 * jax.random.normal(ks[3], (c2, c1, kh, kw), jnp.float32)
    p["b_def"] = 0.1 * jax.random.normal(ks[4], (c2,), jnp.float32)
    # 1x1 conv
    ctot = c2 + offset_c2 + mask_c2
    p["w_1x1"] = 0.2 * jax.random.normal(ks[5], (c2, ctot, 1, 1), jnp.float32)
    p["b_1x1"] = 0.1 * jax.random.normal(ks[6], (c2,), jnp.float32)
    return p


def deform_conv_v3_forward(x_nchw, params, *, k=3, s=1, p=1, d=1):
    """x_nchw: (B, C1, H, W) float32 -> (B, C2, Hout, Wout) float32 (NCHW)."""
    B, C1, H, W = x_nchw.shape
    kh = kw = k
    K = kh * kw
    KC1 = K * C1
    C2 = params["w_def"].shape[0]
    CPAD = max(128, _round_up(3 * K, 128))   # lane-dense offset/mask channel slab
    C2P = _round_up(C2, 128)                 # lane-dense output channel slab

    # --- fused offset + mask conv (one Pallas call, bf16 operands) ------------
    patches, Hout, Wout = im2col_nchw(x_nchw, kh, kw, s, p, d)   # (B, P, K*C1) f32
    P = Hout * Wout

    # column order of the fused conv output: [dy_0..K | dx_0..K | mask_0..K | pad]
    # (torchvision offset layout is interleaved 2k=dy, 2k+1=dx; we de-interleave by
    #  permuting weight COLUMNS here -> free, no strided slices on activations.)
    w_off_mat = params["w_off"].transpose(2, 3, 1, 0).reshape(KC1, 2 * K)
    w_msk_mat = params["w_msk"].transpose(2, 3, 1, 0).reshape(KC1, K)
    w_cat = jnp.concatenate([w_off_mat[:, 0::2], w_off_mat[:, 1::2], w_msk_mat], axis=1)
    w_cat = jnp.pad(w_cat, ((0, 0), (0, CPAD - 3 * K)))
    b_cat = jnp.concatenate(
        [params["b_off"][0::2], params["b_off"][1::2], params["b_msk"]])
    b_cat = jnp.pad(b_cat, (0, CPAD - 3 * K))

    om = fused_offset_mask_conv(
        patches.astype(jnp.bfloat16), w_cat.astype(jnp.bfloat16), b_cat,
        sig_start=2 * K)                                           # (B, P, CPAD) f32

    # --- fold the final 1x1 conv into the deform kernel (pure weight algebra) --
    Ctot = C2 + 3 * K
    W1 = params["w_1x1"].reshape(C2, Ctot).T          # (Ctot, C2)
    W1_y = W1[:C2]                                    # rows for y channels
    W1_off = W1[C2:C2 + 2 * K]                        # rows for interleaved dy/dx
    W1_msk = W1[C2 + 2 * K:]                          # rows for mask channels

    wdef_flat = params["w_def"].transpose(2, 3, 1, 0).reshape(KC1, C2)   # (K*C1, C2)
    w_fused = jnp.pad(wdef_flat @ W1_y, ((0, 0), (0, C2P - C2)))         # (K*C1, C2P)
    w_fused = w_fused.reshape(K, C1, C2P)

    w_om = jnp.concatenate([W1_off[0::2], W1_off[1::2], W1_msk], axis=0)  # (3K, C2)
    w_om = jnp.pad(w_om, ((0, CPAD - 3 * K), (0, C2P - C2)))              # (CPAD, C2P)

    b_tot = jnp.pad(params["b_def"] @ W1_y + params["b_1x1"], (0, C2P - C2))

    # --- deformable conv + fused 1x1 (single Pallas call) ----------------------
    x_flat = x_nchw.transpose(0, 2, 3, 1).reshape(B, H * W, C1).astype(jnp.bfloat16)
    out_p = deform_1x1_fused(
        x_flat, om, w_fused.astype(jnp.bfloat16), w_om, b_tot,
        H=H, W=W, Hout=Hout, Wout=Wout, kh=kh, kw=kw, stride=s, pad=p, dil=d)

    out = out_p[..., :C2].reshape(B, Hout, Wout, C2).transpose(0, 3, 1, 2)   # NCHW
    return out


if __name__ == "__main__":
    B, C1, H, W = 2, 4, 16, 16
    C2, k, s, p, d = 8, 3, 1, 1, 1

    key = jax.random.PRNGKey(0)
    kx, kp = jax.random.split(key)
    x = jax.random.normal(kx, (B, C1, H, W), jnp.float32)
    params = make_params(kp, C1, C2, k, k)

    out = deform_conv_v3_forward(x, params, k=k, s=s, p=p, d=d)
    out = jax.block_until_ready(out)
    assert out.shape == (B, C2, H, W), out.shape
    print("KERNEL_OK")
</pallas_src>

<mosaic_0001>
module attributes {stable_mosaic.version = 11 : i64} {
  func.func @_offset_mask_kernel(%arg0: i32, %arg1: i32, %arg2: memref<1x256x36xbf16, #tpu.memory_space<vmem>>, %arg3: memref<36x128xbf16, #tpu.memory_space<vmem>>, %arg4: memref<1x128xf32, #tpu.memory_space<vmem>>, %arg5: memref<1x256x128xf32, #tpu.memory_space<vmem>>) attributes {dimension_semantics = [#tpu.dimension_semantics<parallel>, #tpu.dimension_semantics<parallel>], iteration_bounds = array<i64: 2, 1>, scalar_prefetch = 0 : i64, scratch_operands = 0 : i64, tpu.core_type = #tpu.core_type<tc>, window_params = [{transform_indices = @transform_0, window_bounds = array<i64: 1, 256, 36>}, {pipeline_mode = #tpu.pipeline_mode<synchronous>, transform_indices = @transform_1, window_bounds = array<i64: 36, 128>}, {pipeline_mode = #tpu.pipeline_mode<synchronous>, transform_indices = @transform_2, window_bounds = array<i64: 1, 128>}, {transform_indices = @transform_3, window_bounds = array<i64: 1, 256, 128>}]} {
    %c0 = arith.constant 0 : index
    %c0_0 = arith.constant 0 : index
    %c0_1 = arith.constant 0 : index
    %0 = vector.load %arg2[%c0, %c0_0, %c0_1] : memref<1x256x36xbf16, #tpu.memory_space<vmem>>, vector<1x256x36xbf16>
    %1 = vector.shape_cast %0 : vector<1x256x36xbf16> to vector<256x36xbf16>
    %c0_2 = arith.constant 0 : index
    %c0_3 = arith.constant 0 : index
    %2 = vector.load %arg3[%c0_2, %c0_3] : memref<36x128xbf16, #tpu.memory_space<vmem>>, vector<36x128xbf16>
    %cst = arith.constant dense<0.000000e+00> : vector<256x128xf32>
    %3 = tpu.matmul %1, %2, %cst {dimension_numbers = #tpu.dot_dimension_numbers<[1], [0], [0], [1], [0, 0, 1, 1], [], []>} : vector<256x36xbf16>, vector<36x128xbf16>, vector<256x128xf32> -> vector<256x128xf32>
    %c0_4 = arith.constant 0 : index
    %c0_5 = arith.constant 0 : index
    %4 = vector.load %arg4[%c0_4, %c0_5] : memref<1x128xf32, #tpu.memory_space<vmem>>, vector<1x128xf32>
    %5 = vector.broadcast %4 : vector<1x128xf32> to vector<256x128xf32>
    %6 = arith.addf %3, %5 : vector<256x128xf32>
    %7 = tpu.iota {dimensions = array<i32: 1>} : vector<256x128xi32>
    %c18_i32 = arith.constant 18 : i32
    %8 = vector.broadcast %c18_i32 : i32 to vector<256x128xi32>
    %9 = arith.cmpi sge, %7, %8 : vector<256x128xi32>
    %10 = arith.negf %6 : vector<256x128xf32>
    %11 = math.exp %10 : vector<256x128xf32>
    %cst_6 = arith.constant 1.000000e+00 : f32
    %12 = vector.broadcast %cst_6 : f32 to vector<256x128xf32>
    %13 = arith.addf %12, %11 : vector<256x128xf32>
    %14 = arith.divf %12, %13 : vector<256x128xf32>
    %15 = arith.select %9, %14, %6 : vector<256x128xi1>, vector<256x128xf32>
    %c0_7 = arith.constant 0 : index
    %c0_8 = arith.constant 0 : index
    %c0_9 = arith.constant 0 : index
    %16 = vector.load %arg5[%c0_7, %c0_8, %c0_9] : memref<1x256x128xf32, #tpu.memory_space<vmem>>, vector<1x256x128xf32>
    %17 = vector.shape_cast %16 : vector<1x256x128xf32> to vector<256x128xf32>
    %18 = vector.shape_cast %15 : vector<256x128xf32> to vector<1x256x128xf32>
    tpu.vector_store %arg5[%c0_7, %c0_8, %c0_9], %18 {strides = array<i32>} : memref<1x256x128xf32, #tpu.memory_space<vmem>>, vector<1x256x128xf32>,
    return
  }
  func.func @transform_0(%arg0: i32, %arg1: i32) -> (i32, i32, i32) {
    %c0_i32 = arith.constant 0 : i32
    %c0_i32_0 = arith.constant 0 : i32
    return %arg0, %arg1, %c0_i32 : i32, i32, i32
  }
  func.func @transform_1(%arg0: i32, %arg1: i32) -> (i32, i32) {
    %c0_i32 = arith.constant 0 : i32
    %c0_i32_0 = arith.constant 0 : i32
    %c0_i32_1 = arith.constant 0 : i32
    return %c0_i32, %c0_i32_0 : i32, i32
  }
  func.func @transform_2(%arg0: i32, %arg1: i32) -> (i32, i32) {
    %c0_i32 = arith.constant 0 : i32
    %c0_i32_0 = arith.constant 0 : i32
    %c0_i32_1 = arith.constant 0 : i32
    return %c0_i32, %c0_i32_0 : i32, i32
  }
  func.func @transform_3(%arg0: i32, %arg1: i32) -> (i32, i32, i32) {
    %c0_i32 = arith.constant 0 : i32
    %c0_i32_0 = arith.constant 0 : i32
    return %arg0, %arg1, %c0_i32 : i32, i32, i32
  }
}

</mosaic_0001>

<llo_original>
// kernel: tpu_custom_call.1
$region0: #{tpu_custom_call.1}
  #allocation0 [shape = 'u32[]', space=smem, size = 0x4, offset = 0x4, fixed_abs, tag = 'smem constant byte address 0x4 - core index']
  #allocation1 [shape = 'u32[144,128]{1,0:T(1,128)}', space=vmem, size = 0x12000, scoped, tag = 'internal scratch']
  %s0 = inlined_call_operand.vmem [shape: bf16[2,256,36], index: 0, kind: input, shape index: {}]
  %s1 = inlined_call_operand.vmem [shape: bf16[36,128], index: 1, kind: input, shape index: {}]
  %s2 = inlined_call_operand.vmem [shape: f32[1,128], index: 2, kind: input, shape index: {}]
  %s3 = inlined_call_operand.hbm [shape: f32[2,256,128], index: 3, kind: output, shape index: {}]
  %s4 = sld [smem:[#allocation0]]
  $region45: #{tpu_custom_call.1} parent=0
    _
  %s6 = ssub.s32 1, %s4
  %s7 = scalar_select 0, %s6, %s4
  $region1: #{tpu_custom_call.1} parent=0
    #allocation2 [shape = 'u8[262144]{0}', space=vmem, size = 0x40000, scoped, tag = 'output window, operand 0']
    #allocation3 [shape = 's32[2]{0}', space=sflag, size = 0x8, scoped, tag = 'scoped memory for tpu_custom_call.1']
    %8 = vsyncpa [#allocation3], 0
    %s9 = scalar_lea.sflag [#allocation3], 1
    %10 = vsyncpa %s9, 0
    loop: start=0, step=1, limit=4
    $region2: #{tpu_custom_call.1} parent=1 // loop_pre_header
      _
    $region3: #{tpu_custom_call.1} parent=1 // loop_header
      %s12 = sphi 0, %s16
      %p13 = scmp.ge.s32.totalorder %s12, 4
      %s19 = sphi 0, %s31
      %s20 = sphi 0, %s27
      %s21 = sphi 0, %s19
      %s22 = sphi 0, %s20
      %s23 = sphi 0, %s21
      %s24 = sphi 0, %s22
      %s36 = sphi 0, %s38
      %s39 = sphi 0, %s36
      %s40 = sphi 0, %s39
      %s56 = sphi 0, %s40
      %s60 = sphi 0, %s60
      %s62 = sphi 0, %s60
      %s63 = sphi 0, %s62
      %s77 = sphi 0, %s63
      %s81 = sphi 0, %s81
      %s83 = sphi 0, %s81
      %s84 = sphi 0, %s83
      %s98 = sphi 0, %s84
      %s106 = sphi 0, %s108
      %s109 = sphi 0, %s106
      %s110 = sphi 0, %s109
      %s126 = sphi 0, %s110
    $region4: #{tpu_custom_call.1} parent=1 // loop_header_branch
      %15 = sbr.rel (%p13) target = $region8
    $region5: #{tpu_custom_call.1} parent=1 // loop_body
      %s17 = ssub.s32 %s12, 1
      %s18 = ssub.s32 %s12, 2
      %s25 = sadd.s32 1, %s20
      %p26 = scmp.ge.s32.totalorder %s25, 1
      %s27 = scalar_select %p26, 0, %s25
      %s28 = sadd.s32 1, %s19
      %s29 = scalar_select %p26, %s28, %s19
      %p30 = scmp.ge.s32.totalorder %s29, 2
      %s31 = scalar_select %p30, 0, %s29
      %s32 = ssub.s32 %s19, %s31
      %s33 = ssub.s32 %s20, %s27
      %s34 = sor.u32 %s32, %s33
      %p35 = scmp.eq.s32.totalorder %s34, 0
      %s37 = sadd.s32 %s36, 1
      %s38 = scalar_select %p35, %s36, %s37
      %p41 = pneg %p35
      %p42 = scmp.eq.s32.totalorder %s12, 1
      %p43 = por %p41, %p42
      %p44 = scmp.ne.s32.totalorder %s36, %s39
      %p45 = scmp.eq.s32.totalorder %s12, 0
      %p46 = por %p44, %p45
      %p47 = scmp.ne.s32.totalorder %s36, %s39
      %p48 = scmp.eq.s32.totalorder %s17, 1
      %p49 = por %p47, %p48
      %p50 = scmp.ne.s32.totalorder %s39, %s40
      %p51 = scmp.eq.s32.totalorder %s17, 0
      %p52 = por %p50, %p51
      %p53 = scmp.ne.s32.totalorder %s39, %s40
      %p54 = scmp.eq.s32.totalorder %s18, 1
      %p55 = por %p53, %p54
      %p57 = scmp.ne.s32.totalorder %s40, %s56
      %p58 = scmp.eq.s32.totalorder %s18, 0
      %p59 = por %p57, %p58
      %s61 = sadd.s32 %s60, 1
      %p64 = scmp.eq.s32.totalorder %s12, 1
      %p65 = scmp.ne.s32.totalorder %s60, %s62
      %p66 = scmp.eq.s32.totalorder %s12, 0
      %p67 = por %p65, %p66
      %p68 = scmp.ne.s32.totalorder %s60, %s62
      %p69 = scmp.eq.s32.totalorder %s17, 1
      %p70 = por %p68, %p69
      %p71 = scmp.ne.s32.totalorder %s62, %s63
      %p72 = scmp.eq.s32.totalorder %s17, 0
      %p73 = por %p71, %p72
      %p74 = scmp.ne.s32.totalorder %s62, %s63
      %p75 = scmp.eq.s32.totalorder %s18, 1
      %p76 = por %p74, %p75
      %p78 = scmp.ne.s32.totalorder %s63, %s77
      %p79 = scmp.eq.s32.totalorder %s18, 0
      %p80 = por %p78, %p79
      %s82 = sadd.s32 %s81, 1
      %p85 = scmp.eq.s32.totalorder %s12, 1
      %p86 = scmp.ne.s32.totalorder %s81, %s83
      %p87 = scmp.eq.s32.totalorder %s12, 0
      %p88 = por %p86, %p87
      %p89 = scmp.ne.s32.totalorder %s81, %s83
      %p90 = scmp.eq.s32.totalorder %s17, 1
      %p91 = por %p89, %p90
      %p92 = scmp.ne.s32.totalorder %s83, %s84
      %p93 = scmp.eq.s32.totalorder %s17, 0
      %p94 = por %p92, %p93
      %p95 = scmp.ne.s32.totalorder %s83, %s84
      %p96 = scmp.eq.s32.totalorder %s18, 1
      %p97 = por %p95, %p96
      %p99 = scmp.ne.s32.totalorder %s84, %s98
      %p100 = scmp.eq.s32.totalorder %s18, 0
      %p101 = por %p99, %p100
      %s102 = ssub.s32 %s19, %s31
      %s103 = ssub.s32 %s20, %s27
      %s104 = sor.u32 %s102, %s103
      %p105 = scmp.eq.s32.totalorder %s104, 0
      %s107 = sadd.s32 %s106, 1
      %s108 = scalar_select %p105, %s106, %s107
      %p111 = pneg %p105
      %p112 = scmp.eq.s32.totalorder %s12, 1
      %p113 = por %p111, %p112
      %p114 = scmp.ne.s32.totalorder %s106, %s109
      %p115 = scmp.eq.s32.totalorder %s12, 0
      %p116 = por %p114, %p115
      %p117 = scmp.ne.s32.totalorder %s106, %s109
      %p118 = scmp.eq.s32.totalorder %s17, 1
      %p119 = por %p117, %p118
      %p120 = scmp.ne.s32.totalorder %s109, %s110
      %p121 = scmp.eq.s32.totalorder %s17, 0
      %p122 = por %p120, %p121
      %p123 = scmp.ne.s32.totalorder %s109, %s110
      %p124 = scmp.eq.s32.totalorder %s18, 1
      %p125 = por %p123, %p124
      %p127 = scmp.ne.s32.totalorder %s110, %s126
      %p128 = scmp.eq.s32.totalorder %s18, 0
      %p129 = por %p127, %p128
      %p130 = scmp.le.s32.totalorder 1, %s12
      %p131 = scmp.lt.s32.totalorder %s12, 3
      %p132 = pnand %p130, %p131
      %p133 = pneg %p132
      // Predicated region
      $region9: #{tpu_custom_call.1} parent=5 // pred_check
        _
      $region10: #{tpu_custom_call.1} parent=5 // pred_check_branch
        %135 = sbr.rel (%p132) target = $region12
      $region11: #{tpu_custom_call.1} parent=5 // pred_region
        %s136 = ssub.s32 %s12, 1
        // Predicated region
        $region13: #{tpu_custom_call.1} parent=11 // pred_check
          %p137 = pneg %p73
        $region14: #{tpu_custom_call.1} parent=11 // pred_check_branch
          %139 = sbr.rel (%p137) target = $region16
        $region15: #{tpu_custom_call.1} parent=11 // pred_region
          _
        $region16: #{tpu_custom_call.1} parent=11 // pred_fallthru
          _
        // Predicated region
        $region17: #{tpu_custom_call.1} parent=11 // pred_check
          %p140 = pneg %p94
        $region18: #{tpu_custom_call.1} parent=11 // pred_check_branch
          %142 = sbr.rel (%p140) target = $region20
        $region19: #{tpu_custom_call.1} parent=11 // pred_region
          _
        $region20: #{tpu_custom_call.1} parent=11 // pred_fallthru
          _
      $region12: #{tpu_custom_call.1} parent=5 // pred_fallthru
        _
      %p143 = scmp.lt.s32.totalorder %s12, 2
      // Predicated region
      $region21: #{tpu_custom_call.1} parent=5 // pred_check
        %p144 = pneg %p143
      $region22: #{tpu_custom_call.1} parent=5 // pred_check_branch
        %146 = sbr.rel (%p144) target = $region24
      $region23: #{tpu_custom_call.1} parent=5 // pred_region
        // Predicated region
        $region25: #{tpu_custom_call.1} parent=23 // pred_check
          %p147 = pneg %p46
        $region26: #{tpu_custom_call.1} parent=23 // pred_check_branch
          %149 = sbr.rel (%p147) target = $region28
        $region27: #{tpu_custom_call.1} parent=23 // pred_region
          %s150 = smul.u32 32, %s20
          %p151 = scmp.lt.s32.totalorder %s19, 1
          %s152 = scalar_select %p151, %s19, 1
          %p153 = scmp.lt.s32.totalorder %s150, 31
          %s154 = scalar_select %p153, %s150, 31
          %s155 = smul.addr %s152, 32
          %s156 = sadd.s32 %s154, %s155
          %s157 = smul.addr %s156, 4
          %s158 = scalar_lea.vmem %s0, %s157
          %s159 = smul.u32 32, %s20
        $region28: #{tpu_custom_call.1} parent=23 // pred_fallthru
          _
      $region24: #{tpu_custom_call.1} parent=5 // pred_fallthru
        _
      %p160 = scmp.le.s32.totalorder 1, %s12
      %p161 = scmp.lt.s32.totalorder %s12, 3
      %p162 = pnand %p160, %p161
      %p163 = pneg %p162
      // Predicated region
      $region29: #{tpu_custom_call.1} parent=5 // pred_check
        _
      $region30: #{tpu_custom_call.1} parent=5 // pred_check_branch
        %165 = sbr.rel (%p162) target = $region32
      $region31: #{tpu_custom_call.1} parent=5 // pred_region
        %s166 = ssub.s32 %s12, 1
        %s167 = smul.u32 32, %s22
        %p168 = scmp.lt.s32.totalorder %s21, 1
        %s169 = scalar_select %p168, %s21, 1
        %p170 = scmp.lt.s32.totalorder %s167, 31
        %s171 = scalar_select %p170, %s167, 31
        %s172 = smul.addr %s169, 32
        %s173 = sadd.s32 %s171, %s172
        %s174 = smul.addr %s173, 4
        %s175 = scalar_lea.vmem %s0, %s174
        %p176 = pneg %p52
        %p177 = pneg %p49
        %p178 = pneg %p73
        %p179 = pneg %p70
        %p180 = pneg %p94
        %p181 = pneg %p91
        %p182 = pneg %p122
        %p183 = pneg %p119
        %s184 = sand.u32 %s109, 1
        %s185 = scalar_lea.sflag [#allocation3], %s184
        %s186 = sand.u32 %s109, 1
        %s187 = smul.addr %s186, 256
        %s188 = scalar_lea.vmem [#allocation2], %s187
        %s189 = smul.u32 32, %s22
        %p190 = scmp.lt.s32.totalorder %s21, 1
        %s191 = scalar_select %p190, %s21, 1
        %p192 = scmp.lt.s32.totalorder %s189, 31
        %s193 = scalar_select %p192, %s189, 31
        %s194 = smul.addr %s191, 32
        %s195 = sadd.s32 %s193, %s194
        %s196 = smul.addr %s195, 4
        %s197 = scalar_lea.vmem %s0, %s196
        %s198 = smul.u32 32, %s22
        %s199 = smul.u32 32, %s22
        %v201 = vld [vmem:[%s197] sm:$0xf]
        %v202 = vld [vmem:[%s197 + $0x4] sm:$0xf]
        %v203 = vld [vmem:[%s197 + $0x8] sm:$0xf]
        %v204 = vld [vmem:[%s197 + $0xc] sm:$0xf]
        %v205 = vld [vmem:[%s197 + $0x10] sm:$0xf]
        %v206 = vld [vmem:[%s197 + $0x14] sm:$0xf]
        %v207 = vld [vmem:[%s197 + $0x18] sm:$0xf]
        %v208 = vld [vmem:[%s197 + $0x1c] sm:$0xf]
        %v209 = vld [vmem:[%s197 + $0x20] sm:$0xf]
        %v210 = vld [vmem:[%s197 + $0x24] sm:$0xf]
        %v211 = vld [vmem:[%s197 + $0x28] sm:$0xf]
        %v212 = vld [vmem:[%s197 + $0x2c] sm:$0xf]
        %v213 = vld [vmem:[%s197 + $0x30] sm:$0xf]
        %v214 = vld [vmem:[%s197 + $0x34] sm:$0xf]
        %v215 = vld [vmem:[%s197 + $0x38] sm:$0xf]
        %v216 = vld [vmem:[%s197 + $0x3c] sm:$0xf]
        %v217 = vld [vmem:[%s197 + $0x40] sm:$0xf]
        %v218 = vld [vmem:[%s197 + $0x44] sm:$0xf]
        %v219 = vld [vmem:[%s197 + $0x48] sm:$0xf]
        %v220 = vld [vmem:[%s197 + $0x4c] sm:$0xf]
        %v221 = vld [vmem:[%s197 + $0x50] sm:$0xf]
        %v222 = vld [vmem:[%s197 + $0x54] sm:$0xf]
        %v223 = vld [vmem:[%s197 + $0x58] sm:$0xf]
        %v224 = vld [vmem:[%s197 + $0x5c] sm:$0xf]
        %v225 = vld [vmem:[%s197 + $0x60] sm:$0xf]
        %v226 = vld [vmem:[%s197 + $0x64] sm:$0xf]
        %v227 = vld [vmem:[%s197 + $0x68] sm:$0xf]
        %v228 = vld [vmem:[%s197 + $0x6c] sm:$0xf]
        %v229 = vld [vmem:[%s197 + $0x70] sm:$0xf]
        %v230 = vld [vmem:[%s197 + $0x74] sm:$0xf]
        %v231 = vld [vmem:[%s197 + $0x78] sm:$0xf]
        %v232 = vld [vmem:[%s197 + $0x7c] sm:$0xf]
        %v233 = vld [vmem:[%s1] sm:$0xf]
        %v234 = vld [vmem:[%s1 + $0x4] sm:$0xf]
        %v235 = vld [vmem:[%s1 + $0x8] sm:$0xf]
        %v236 = vld [vmem:[%s1 + $0xc] sm:$0xf]
        %v237 = vld [vmem:[%s1 + $0x10] sm:$0x3]
        %v238 = vld [vmem:[%s2] sm:$0x1]
        %v240 = vlaneseq
        %v241 = vshrl.u32 %v240, 7
        %v242 = vsub.s32 0, %v241
        %v243 = vrot.slane %v238, %v242
        %v277 = vunpack.c.l.b16 %v201
        %v278 = vunpack.c.l.b16 %v202
        %v279 = vunpack.c.l.b16 %v203
        %v280 = vunpack.c.l.b16 %v204
        %v281 = vunpack.c.l.b16 %v205
        %v282 = vunpack.c.l.b16 %v206
        %v283 = vunpack.c.l.b16 %v207
        %v284 = vunpack.c.l.b16 %v208
        %v285 = vunpack.c.l.b16 %v209
        %v286 = vunpack.c.l.b16 %v210
        %v287 = vunpack.c.l.b16 %v211
        %v288 = vunpack.c.l.b16 %v212
        %v289 = vunpack.c.l.b16 %v213
        %v290 = vunpack.c.l.b16 %v214
        %v291 = vunpack.c.l.b16 %v215
        %v292 = vunpack.c.l.b16 %v216
        %v293 = vunpack.c.l.b16 %v217
        %v294 = vunpack.c.l.b16 %v218
        %v295 = vunpack.c.l.b16 %v219
        %v296 = vunpack.c.l.b16 %v220
        %v297 = vunpack.c.l.b16 %v221
        %v298 = vunpack.c.l.b16 %v222
        %v299 = vunpack.c.l.b16 %v223
        %v300 = vunpack.c.l.b16 %v224
        %v301 = vunpack.c.l.b16 %v225
        %v302 = vunpack.c.l.b16 %v226
        %v303 = vunpack.c.l.b16 %v227
        %v304 = vunpack.c.l.b16 %v228
        %v305 = vunpack.c.l.b16 %v229
        %v306 = vunpack.c.l.b16 %v230
        %v307 = vunpack.c.l.b16 %v231
        %v308 = vunpack.c.l.b16 %v232
        %v309 = vpack.c.b16 %v278, %v277
        %v310 = vpack.c.b16 %v280, %v279
        %v311 = vpack.c.b16 %v282, %v281
        %v312 = vpack.c.b16 %v284, %v283
        %v313 = vpack.c.b16 %v286, %v285
        %v314 = vpack.c.b16 %v288, %v287
        %v315 = vpack.c.b16 %v290, %v289
        %v316 = vpack.c.b16 %v292, %v291
        %v317 = vpack.c.b16 %v294, %v293
        %v318 = vpack.c.b16 %v296, %v295
        %v319 = vpack.c.b16 %v298, %v297
        %v320 = vpack.c.b16 %v300, %v299
        %v321 = vpack.c.b16 %v302, %v301
        %v322 = vpack.c.b16 %v304, %v303
        %v323 = vpack.c.b16 %v306, %v305
        %v324 = vpack.c.b16 %v308, %v307
        %v330 = vunpack.c.l.b16 %v233
        %v331 = vunpack.c.l.b16 %v234
        %v332 = vunpack.c.l.b16 %v235
        %v333 = vunpack.c.l.b16 %v236
        %v334 = vunpack.c.l.b16 %v237
        %v335 = vpack.c.b16 %v331, %v330
        %v336 = vpack.c.b16 %v333, %v332
        %v337 = vpack.c.b16 %v334, %v334
        %vm340 = vcmask 293888
        %v342 = vsel %vm340, %v309, 0
        %v345 = vsel %vm340, %v310, 0
        %v348 = vsel %vm340, %v311, 0
        %v351 = vsel %vm340, %v312, 0
        %v354 = vsel %vm340, %v313, 0
        %v357 = vsel %vm340, %v314, 0
        %v360 = vsel %vm340, %v315, 0
        %v363 = vsel %vm340, %v316, 0
        %v366 = vsel %vm340, %v317, 0
        %v369 = vsel %vm340, %v318, 0
        %v372 = vsel %vm340, %v319, 0
        %v375 = vsel %vm340, %v320, 0
        %v378 = vsel %vm340, %v321, 0
        %v381 = vsel %vm340, %v322, 0
        %v384 = vsel %vm340, %v323, 0
        %v387 = vsel %vm340, %v324, 0
        %vm389 = vcmask 1041408
        %v391 = vsel %vm389, %v337, 0
        %393 = vmatprep.subr.bf16.mxu0 0
        %394 = vmatpush1.bf16.msra.mxu0 %v335
        %395 = vmatprep.subr.bf16.mxu0 0
        %396 = vmatpush1.bf16.msra.mxu0 %v336
        %397 = vmatprep.subr.bf16.mxu0 0
        %398 = vmatpush1.bf16.msra.mxu0 %v391
        %399 = vmatprep.subr.bf16.mxu0 0
        %400 = vmatpush1.bf16.msra.mxu0 0
        %401 = vmatprep.subr.bf16.mxu0 0
        %402 = vmatpush1.bf16.msra.mxu0 0
        %403 = vmatprep.subr.bf16.mxu0 0
        %404 = vmatpush1.bf16.msra.mxu0 0
        %405 = vmatprep.subr.bf16.mxu0 0
        %406 = vmatpush1.bf16.msra.mxu0 0
        %407 = vmatprep.subr.bf16.mxu0 0
        %408 = vmatpush1.bf16.msra.mxu0 0
        %409 = vmatprep.subr.bf16.mxu0 0
        %410 = vmatpush1.bf16.msra.mxu0 0
        %411 = vmatprep.subr.bf16.mxu0 0
        %412 = vmatpush1.bf16.msra.mxu0 0
        %413 = vmatprep.subr.bf16.mxu0 0
        %414 = vmatpush1.bf16.msra.mxu0 0
        %415 = vmatprep.subr.bf16.mxu0 0
        %416 = vmatpush1.bf16.msra.mxu0 0
        %417 = vmatprep.subr.bf16.mxu0 0
        %418 = vmatpush1.bf16.msra.mxu0 0
        %419 = vmatprep.subr.bf16.mxu0 0
        %420 = vmatpush1.bf16.msra.mxu0 0
        %421 = vmatprep.subr.bf16.mxu0 0
        %422 = vmatpush1.bf16.msra.mxu0 0
        %423 = vmatprep.subr.bf16.mxu0 0
        %424 = vmatpush1.bf16.msra.mxu0 0
        %425 = vmatprep.mubr.bf16.mxu0 0
        %426 = vmatmul.mubr.bf16.gmra.mrb[0].mxu0 %v342
        %v427 = vpop.f32.mrb[0].mxu0
        %v428 = vadd.f32 %v243, %v427
        %v429 = vpop.f32.mrb[0].mxu0
        %v430 = vpop.f32.mrb[0].mxu0
        %v431 = vadd.f32 %v243, %v430
        %v432 = vpop.f32.mrb[0].mxu0
        %433 = vmatprep.mubr.bf16.mxu0 0
        %434 = vmatmul.mubr.bf16.gmra.mrb[0].mxu0 %v345
        %v435 = vpop.f32.mrb[0].mxu0
        %v436 = vadd.f32 %v243, %v435
        %v437 = vpop.f32.mrb[0].mxu0
        %v438 = vpop.f32.mrb[0].mxu0
        %v439 = vadd.f32 %v243, %v438
        %v440 = vpop.f32.mrb[0].mxu0
        %441 = vmatprep.mubr.bf16.mxu0 0
        %442 = vmatmul.mubr.bf16.gmra.mrb[0].mxu0 %v348
        %v443 = vpop.f32.mrb[0].mxu0
        %v444 = vadd.f32 %v243, %v443
        %v445 = vpop.f32.mrb[0].mxu0
        %v446 = vpop.f32.mrb[0].mxu0
        %v447 = vadd.f32 %v243, %v446
        %v448 = vpop.f32.mrb[0].mxu0
        %449 = vmatprep.mubr.bf16.mxu0 0
        %450 = vmatmul.mubr.bf16.gmra.mrb[0].mxu0 %v351
        %v451 = vpop.f32.mrb[0].mxu0
        %v452 = vadd.f32 %v243, %v451
        %v453 = vpop.f32.mrb[0].mxu0
        %v454 = vpop.f32.mrb[0].mxu0
        %v455 = vadd.f32 %v243, %v454
        %v456 = vpop.f32.mrb[0].mxu0
        %457 = vmatprep.mubr.bf16.mxu0 0
        %458 = vmatmul.mubr.bf16.gmra.mrb[0].mxu0 %v354
        %v459 = vpop.f32.mrb[0].mxu0
        %v460 = vadd.f32 %v243, %v459
        %v461 = vpop.f32.mrb[0].mxu0
        %v462 = vpop.f32.mrb[0].mxu0
        %v463 = vadd.f32 %v243, %v462
        %v464 = vpop.f32.mrb[0].mxu0
        %465 = vmatprep.mubr.bf16.mxu0 0
        %466 = vmatmul.mubr.bf16.gmra.mrb[0].mxu0 %v357
        %v467 = vpop.f32.mrb[0].mxu0
        %v468 = vadd.f32 %v243, %v467
        %v469 = vpop.f32.mrb[0].mxu0
        %v470 = vpop.f32.mrb[0].mxu0
        %v471 = vadd.f32 %v243, %v470
        %v472 = vpop.f32.mrb[0].mxu0
        %473 = vmatprep.mubr.bf16.mxu0 0
        %474 = vmatmul.mubr.bf16.gmra.mrb[0].mxu0 %v360
        %v475 = vpop.f32.mrb[0].mxu0
        %v476 = vadd.f32 %v243, %v475
        %v477 = vpop.f32.mrb[0].mxu0
        %v478 = vpop.f32.mrb[0].mxu0
        %v479 = vadd.f32 %v243, %v478
        %v480 = vpop.f32.mrb[0].mxu0
        %481 = vmatprep.mubr.bf16.mxu0 0
        %482 = vmatmul.mubr.bf16.gmra.mrb[0].mxu0 %v363
        %v483 = vpop.f32.mrb[0].mxu0
        %v484 = vadd.f32 %v243, %v483
        %v485 = vpop.f32.mrb[0].mxu0
        %v486 = vpop.f32.mrb[0].mxu0
        %v487 = vadd.f32 %v243, %v486
        %v488 = vpop.f32.mrb[0].mxu0
        %489 = vmatprep.mubr.bf16.mxu0 0
        %490 = vmatmul.mubr.bf16.gmra.mrb[0].mxu0 %v366
        %v491 = vpop.f32.mrb[0].mxu0
        %v492 = vadd.f32 %v243, %v491
        %v493 = vpop.f32.mrb[0].mxu0
        %v494 = vpop.f32.mrb[0].mxu0
        %v495 = vadd.f32 %v243, %v494
        %v496 = vpop.f32.mrb[0].mxu0
        %497 = vmatprep.mubr.bf16.mxu0 0
        %498 = vmatmul.mubr.bf16.gmra.mrb[0].mxu0 %v369
        %v499 = vpop.f32.mrb[0].mxu0
        %v500 = vadd.f32 %v243, %v499
        %v501 = vpop.f32.mrb[0].mxu0
        %v502 = vpop.f32.mrb[0].mxu0
        %v503 = vadd.f32 %v243, %v502
        %v504 = vpop.f32.mrb[0].mxu0
        %505 = vmatprep.mubr.bf16.mxu0 0
        %506 = vmatmul.mubr.bf16.gmra.mrb[0].mxu0 %v372
        %v507 = vpop.f32.mrb[0].mxu0
        %v508 = vadd.f32 %v243, %v507
        %v509 = vpop.f32.mrb[0].mxu0
        %v510 = vpop.f32.mrb[0].mxu0
        %v511 = vadd.f32 %v243, %v510
        %v512 = vpop.f32.mrb[0].mxu0
        %513 = vmatprep.mubr.bf16.mxu0 0
        %514 = vmatmul.mubr.bf16.gmra.mrb[0].mxu0 %v375
        %v515 = vpop.f32.mrb[0].mxu0
        %v516 = vadd.f32 %v243, %v515
        %v517 = vpop.f32.mrb[0].mxu0
        %v518 = vpop.f32.mrb[0].mxu0
        %v519 = vadd.f32 %v243, %v518
        %v520 = vpop.f32.mrb[0].mxu0
        %521 = vmatprep.mubr.bf16.mxu0 0
        %522 = vmatmul.mubr.bf16.gmra.mrb[0].mxu0 %v378
        %v523 = vpop.f32.mrb[0].mxu0
        %v524 = vadd.f32 %v243, %v523
        %v525 = vpop.f32.mrb[0].mxu0
        %v526 = vpop.f32.mrb[0].mxu0
        %v527 = vadd.f32 %v243, %v526
        %v528 = vpop.f32.mrb[0].mxu0
        %529 = vmatprep.mubr.bf16.mxu0 0
        %530 = vmatmul.mubr.bf16.gmra.mrb[0].mxu0 %v381
        %v531 = vpop.f32.mrb[0].mxu0
        %v532 = vadd.f32 %v243, %v531
        %v533 = vpop.f32.mrb[0].mxu0
        %v534 = vpop.f32.mrb[0].mxu0
        %v535 = vadd.f32 %v243, %v534
        %v536 = vpop.f32.mrb[0].mxu0
        %537 = vmatprep.mubr.bf16.mxu0 0
        %538 = vmatmul.mubr.bf16.gmra.mrb[0].mxu0 %v384
        %v539 = vpop.f32.mrb[0].mxu0
        %v540 = vadd.f32 %v243, %v539
        %v541 = vpop.f32.mrb[0].mxu0
        %v542 = vpop.f32.mrb[0].mxu0
        %v543 = vadd.f32 %v243, %v542
        %v544 = vpop.f32.mrb[0].mxu0
        %545 = vmatprep.mubr.bf16.mxu0 0
        %546 = vmatmul.mubr.bf16.gmra.mrb[0].mxu0 %v387
        %v547 = vpop.f32.mrb[0].mxu0
        %v548 = vadd.f32 %v243, %v547
        %v549 = vpop.f32.mrb[0].mxu0
        %v550 = vpop.f32.mrb[0].mxu0
        %v551 = vadd.f32 %v243, %v550
        %v552 = vpop.f32.mrb[0].mxu0
        %553 = vdwg.mxu0
        %v554 = vlaneseq
        %v555 = vand.u32 %v554, 127
        %vm556 = vcmp.ge.s32.totalorder %v555, 18
        %v557 = vxor.u32 %v428, 2147483648
        %v558 = vxor.u32 %v431, 2147483648
        %v559 = vxor.u32 %v436, 2147483648
        %v560 = vxor.u32 %v439, 2147483648
        %v561 = vxor.u32 %v444, 2147483648
        %v562 = vxor.u32 %v447, 2147483648
        %v563 = vxor.u32 %v452, 2147483648
        %v564 = vxor.u32 %v455, 2147483648
        %v565 = vxor.u32 %v460, 2147483648
        %v566 = vxor.u32 %v463, 2147483648
        %v567 = vxor.u32 %v468, 2147483648
        %v568 = vxor.u32 %v471, 2147483648
        %v569 = vxor.u32 %v476, 2147483648
        %v570 = vxor.u32 %v479, 2147483648
        %v571 = vxor.u32 %v484, 2147483648
        %v572 = vxor.u32 %v487, 2147483648
        %v573 = vxor.u32 %v492, 2147483648
        %v574 = vxor.u32 %v495, 2147483648
        %v575 = vxor.u32 %v500, 2147483648
        %v576 = vxor.u32 %v503, 2147483648
        %v577 = vxor.u32 %v508, 2147483648
        %v578 = vxor.u32 %v511, 2147483648
        %v579 = vxor.u32 %v516, 2147483648
        %v580 = vxor.u32 %v519, 2147483648
        %v581 = vxor.u32 %v524, 2147483648
        %v582 = vxor.u32 %v527, 2147483648
        %v583 = vxor.u32 %v532, 2147483648
        %v584 = vxor.u32 %v535, 2147483648
        %v585 = vxor.u32 %v540, 2147483648
        %v586 = vxor.u32 %v543, 2147483648
        %v587 = vxor.u32 %v548, 2147483648
        %v588 = vxor.u32 %v551, 2147483648
        %v589 = vmul.f32 %v557, 1.442695
        %v590 = vpow.pop %v589
        %v591 = vmul.f32 %v558, 1.442695
        %v592 = vpow.pop %v591
        %v593 = vmul.f32 %v559, 1.442695
        %v594 = vpow.pop %v593
        %v595 = vmul.f32 %v560, 1.442695
        %v596 = vpow.pop %v595
        %v597 = vmul.f32 %v561, 1.442695
        %v598 = vpow.pop %v597
        %v599 = vmul.f32 %v562, 1.442695
        %v600 = vpow.pop %v599
        %v601 = vmul.f32 %v563, 1.442695
        %v602 = vpow.pop %v601
        %v603 = vmul.f32 %v564, 1.442695
        %v604 = vpow.pop %v603
        %v605 = vmul.f32 %v565, 1.442695
        %v606 = vpow.pop %v605
        %v607 = vmul.f32 %v566, 1.442695
        %v608 = vpow.pop %v607
        %v609 = vmul.f32 %v567, 1.442695
        %v610 = vpow.pop %v609
        %v611 = vmul.f32 %v568, 1.442695
        %v612 = vpow.pop %v611
        %v613 = vmul.f32 %v569, 1.442695
        %v614 = vpow.pop %v613
        %v615 = vmul.f32 %v570, 1.442695
        %v616 = vpow.pop %v615
        %v617 = vmul.f32 %v571, 1.442695
        %v618 = vpow.pop %v617
        %v619 = vmul.f32 %v572, 1.442695
        %v620 = vpow.pop %v619
        %v621 = vmul.f32 %v573, 1.442695
        %v622 = vpow.pop %v621
        %v623 = vmul.f32 %v574, 1.442695
        %v624 = vpow.pop %v623
        %v625 = vmul.f32 %v575, 1.442695
        %v626 = vpow.pop %v625
        %v627 = vmul.f32 %v576, 1.442695
        %v628 = vpow.pop %v627
        %v629 = vmul.f32 %v577, 1.442695
        %v630 = vpow.pop %v629
        %v631 = vmul.f32 %v578, 1.442695
        %v632 = vpow.pop %v631
        %v633 = vmul.f32 %v579, 1.442695
        %v634 = vpow.pop %v633
        %v635 = vmul.f32 %v580, 1.442695
        %v636 = vpow.pop %v635
        %v637 = vmul.f32 %v581, 1.442695
        %v638 = vpow.pop %v637
        %v639 = vmul.f32 %v582, 1.442695
        %v640 = vpow.pop %v639
        %v641 = vmul.f32 %v583, 1.442695
        %v642 = vpow.pop %v641
        %v643 = vmul.f32 %v584, 1.442695
        %v644 = vpow.pop %v643
        %v645 = vmul.f32 %v585, 1.442695
        %v646 = vpow.pop %v645
        %v647 = vmul.f32 %v586, 1.442695
        %v648 = vpow.pop %v647
        %v649 = vmul.f32 %v587, 1.442695
        %v650 = vpow.pop %v649
        %v651 = vmul.f32 %v588, 1.442695
        %v652 = vpow.pop %v651
        %v653 = vadd.f32 %v590, 1.0
        %v654 = vadd.f32 %v592, 1.0
        %v655 = vadd.f32 %v594, 1.0
        %v656 = vadd.f32 %v596, 1.0
        %v657 = vadd.f32 %v598, 1.0
        %v658 = vadd.f32 %v600, 1.0
        %v659 = vadd.f32 %v602, 1.0
        %v660 = vadd.f32 %v604, 1.0
        %v661 = vadd.f32 %v606, 1.0
        %v662 = vadd.f32 %v608, 1.0
        %v663 = vadd.f32 %v610, 1.0
        %v664 = vadd.f32 %v612, 1.0
        %v665 = vadd.f32 %v614, 1.0
        %v666 = vadd.f32 %v616, 1.0
        %v667 = vadd.f32 %v618, 1.0
        %v668 = vadd.f32 %v620, 1.0
        %v669 = vadd.f32 %v622, 1.0
        %v670 = vadd.f32 %v624, 1.0
        %v671 = vadd.f32 %v626, 1.0
        %v672 = vadd.f32 %v628, 1.0
        %v673 = vadd.f32 %v630, 1.0
        %v674 = vadd.f32 %v632, 1.0
        %v675 = vadd.f32 %v634, 1.0
        %v676 = vadd.f32 %v636, 1.0
        %v677 = vadd.f32 %v638, 1.0
        %v678 = vadd.f32 %v640, 1.0
        %v679 = vadd.f32 %v642, 1.0
        %v680 = vadd.f32 %v644, 1.0
        %v681 = vadd.f32 %v646, 1.0
        %v682 = vadd.f32 %v648, 1.0
        %v683 = vadd.f32 %v650, 1.0
        %v684 = vadd.f32 %v652, 1.0
        %v685 = vrcp.pop %v653
        %v686 = vmul.f32 1.0, %v685
        %v687 = vrcp.pop %v654
        %v688 = vmul.f32 1.0, %v687
        %v689 = vrcp.pop %v655
        %v690 = vmul.f32 1.0, %v689
        %v691 = vrcp.pop %v656
        %v692 = vmul.f32 1.0, %v691
        %v693 = vrcp.pop %v657
        %v694 = vmul.f32 1.0, %v693
        %v695 = vrcp.pop %v658
        %v696 = vmul.f32 1.0, %v695
        %v697 = vrcp.pop %v659
        %v698 = vmul.f32 1.0, %v697
        %v699 = vrcp.pop %v660
        %v700 = vmul.f32 1.0, %v699
        %v701 = vrcp.pop %v661
        %v702 = vmul.f32 1.0, %v701
        %v703 = vrcp.pop %v662
        %v704 = vmul.f32 1.0, %v703
        %v705 = vrcp.pop %v663
        %v706 = vmul.f32 1.0, %v705
        %v707 = vrcp.pop %v664
        %v708 = vmul.f32 1.0, %v707
        %v709 = vrcp.pop %v665
        %v710 = vmul.f32 1.0, %v709
        %v711 = vrcp.pop %v666
        %v712 = vmul.f32 1.0, %v711
        %v713 = vrcp.pop %v667
        %v714 = vmul.f32 1.0, %v713
        %v715 = vrcp.pop %v668
        %v716 = vmul.f32 1.0, %v715
        %v717 = vrcp.pop %v669
        %v718 = vmul.f32 1.0, %v717
        %v719 = vrcp.pop %v670
        %v720 = vmul.f32 1.0, %v719
        %v721 = vrcp.pop %v671
        %v722 = vmul.f32 1.0, %v721
        %v723 = vrcp.pop %v672
        %v724 = vmul.f32 1.0, %v723
        %v725 = vrcp.pop %v673
        %v726 = vmul.f32 1.0, %v725
        %v727 = vrcp.pop %v674
        %v728 = vmul.f32 1.0, %v727
        %v729 = vrcp.pop %v675
        %v730 = vmul.f32 1.0, %v729
        %v731 = vrcp.pop %v676
        %v732 = vmul.f32 1.0, %v731
        %v733 = vrcp.pop %v677
        %v734 = vmul.f32 1.0, %v733
        %v735 = vrcp.pop %v678
        %v736 = vmul.f32 1.0, %v735
        %v737 = vrcp.pop %v679
        %v738 = vmul.f32 1.0, %v737
        %v739 = vrcp.pop %v680
        %v740 = vmul.f32 1.0, %v739
        %v741 = vrcp.pop %v681
        %v742 = vmul.f32 1.0, %v741
        %v743 = vrcp.pop %v682
        %v744 = vmul.f32 1.0, %v743
        %v745 = vrcp.pop %v683
        %v746 = vmul.f32 1.0, %v745
        %v747 = vrcp.pop %v684
        %v748 = vmul.f32 1.0, %v747
        %v749 = vsel %vm556, %v686, %v428
        %v750 = vsel %vm556, %v688, %v431
        %v751 = vsel %vm556, %v690, %v436
        %v752 = vsel %vm556, %v692, %v439
        %v753 = vsel %vm556, %v694, %v444
        %v754 = vsel %vm556, %v696, %v447
        %v755 = vsel %vm556, %v698, %v452
        %v756 = vsel %vm556, %v700, %v455
        %v757 = vsel %vm556, %v702, %v460
        %v758 = vsel %vm556, %v704, %v463
        %v759 = vsel %vm556, %v706, %v468
        %v760 = vsel %vm556, %v708, %v471
        %v761 = vsel %vm556, %v710, %v476
        %v762 = vsel %vm556, %v712, %v479
        %v763 = vsel %vm556, %v714, %v484
        %v764 = vsel %vm556, %v716, %v487
        %v765 = vsel %vm556, %v718, %v492
        %v766 = vsel %vm556, %v720, %v495
        %v767 = vsel %vm556, %v722, %v500
        %v768 = vsel %vm556, %v724, %v503
        %v769 = vsel %vm556, %v726, %v508
        %v770 = vsel %vm556, %v728, %v511
        %v771 = vsel %vm556, %v730, %v516
        %v772 = vsel %vm556, %v732, %v519
        %v773 = vsel %vm556, %v734, %v524
        %v774 = vsel %vm556, %v736, %v527
        %v775 = vsel %vm556, %v738, %v532
        %v776 = vsel %vm556, %v740, %v535
        %v777 = vsel %vm556, %v742, %v540
        %v778 = vsel %vm556, %v744, %v543
        %v779 = vsel %vm556, %v746, %v548
        %v780 = vsel %vm556, %v748, %v551
        %781 = vst [vmem:[%s188] sm:$0xff] %v749
        %782 = vst [vmem:[%s188 + $0x8] sm:$0xff] %v750
        %783 = vst [vmem:[%s188 + $0x10] sm:$0xff] %v751
        %784 = vst [vmem:[%s188 + $0x18] sm:$0xff] %v752
        %785 = vst [vmem:[%s188 + $0x20] sm:$0xff] %v753
        %786 = vst [vmem:[%s188 + $0x28] sm:$0xff] %v754
        %787 = vst [vmem:[%s188 + $0x30] sm:$0xff] %v755
        %788 = vst [vmem:[%s188 + $0x38] sm:$0xff] %v756
        %789 = vst [vmem:[%s188 + $0x40] sm:$0xff] %v757
        %790 = vst [vmem:[%s188 + $0x48] sm:$0xff] %v758
        %791 = vst [vmem:[%s188 + $0x50] sm:$0xff] %v759
        %792 = vst [vmem:[%s188 + $0x58] sm:$0xff] %v760
        %793 = vst [vmem:[%s188 + $0x60] sm:$0xff] %v761
        %794 = vst [vmem:[%s188 + $0x68] sm:$0xff] %v762
        %795 = vst [vmem:[%s188 + $0x70] sm:$0xff] %v763
        %796 = vst [vmem:[%s188 + $0x78] sm:$0xff] %v764
        %797 = vst [vmem:[%s188 + $0x80] sm:$0xff] %v765
        %798 = vst [vmem:[%s188 + $0x88] sm:$0xff] %v766
        %799 = vst [vmem:[%s188 + $0x90] sm:$0xff] %v767
        %800 = vst [vmem:[%s188 + $0x98] sm:$0xff] %v768
        %801 = vst [vmem:[%s188 + $0xa0] sm:$0xff] %v769
        %802 = vst [vmem:[%s188 + $0xa8] sm:$0xff] %v770
        %803 = vst [vmem:[%s188 + $0xb0] sm:$0xff] %v771
        %804 = vst [vmem:[%s188 + $0xb8] sm:$0xff] %v772
        %805 = vst [vmem:[%s188 + $0xc0] sm:$0xff] %v773
        %806 = vst [vmem:[%s188 + $0xc8] sm:$0xff] %v774
        %807 = vst [vmem:[%s188 + $0xd0] sm:$0xff] %v775
        %808 = vst [vmem:[%s188 + $0xd8] sm:$0xff] %v776
        %809 = vst [vmem:[%s188 + $0xe0] sm:$0xff] %v777
        %810 = vst [vmem:[%s188 + $0xe8] sm:$0xff] %v778
        %811 = vst [vmem:[%s188 + $0xf0] sm:$0xff] %v779
        %812 = vst [vmem:[%s188 + $0xf8] sm:$0xff] %v780
        %s813 = sand.u32 %s109, 1
        %s814 = scalar_lea.sflag [#allocation3], %s813
        %s815 = sand.u32 %s109, 1
        %s816 = smul.addr %s815, 256
        %s817 = scalar_lea.vmem [#allocation2], %s816
        // Predicated region
        $region33: #{tpu_custom_call.1} parent=31 // pred_check
          %p818 = pneg %p119
        $region34: #{tpu_custom_call.1} parent=31 // pred_check_branch
          %820 = sbr.rel (%p818) target = $region36
        $region35: #{tpu_custom_call.1} parent=31 // pred_region
          %s821 = smul.u32 32, %s22
          %s823 = ssub.s32 4096, 4096
          %824 = vsyncadd %s814, %s823
          %s825 = smul.addr %s21, 32
          %s826 = sadd.s32 %s821, %s825
          %s827 = smul.addr %s826, 128
          %s828 = scalar_lea.hbm %s3, %s827
          %s829 = sshll.u32 %s817, 4
          %s830 = int_to_ptr.vmem [resolvable:$true] %s829
          %835 = dma.vmem_to_hbm [thread:$0]  %s830, 4096, %s828, %s814, 128, 128, 8
        $region36: #{tpu_custom_call.1} parent=31 // pred_fallthru
          _
      $region32: #{tpu_custom_call.1} parent=5 // pred_fallthru
        _
      %p836 = scmp.le.s32.totalorder 2, %s12
      // Predicated region
      $region37: #{tpu_custom_call.1} parent=5 // pred_check
        %p837 = pneg %p836
      $region38: #{tpu_custom_call.1} parent=5 // pred_check_branch
        %839 = sbr.rel (%p837) target = $region40
      $region39: #{tpu_custom_call.1} parent=5 // pred_region
        %s840 = ssub.s32 %s12, 2
        // Predicated region
        $region41: #{tpu_custom_call.1} parent=39 // pred_check
          %p841 = pneg %p125
        $region42: #{tpu_custom_call.1} parent=39 // pred_check_branch
          %843 = sbr.rel (%p841) target = $region44
        $region43: #{tpu_custom_call.1} parent=39 // pred_region
          %s844 = sand.u32 %s110, 1
          %s845 = scalar_lea.sflag [#allocation3], %s844
          %s846 = sand.u32 %s110, 1
          %s847 = smul.addr %s846, 256
          %s848 = scalar_lea.vmem [#allocation2], %s847
          %849 = dma.done %s845, 4096
        $region44: #{tpu_custom_call.1} parent=39 // pred_fallthru
          _
      $region40: #{tpu_custom_call.1} parent=5 // pred_fallthru
        _
    $region6: #{tpu_custom_call.1} parent=1 // loop_footer
      %s16 = sadd.s32 1, %s12
    $region7: #{tpu_custom_call.1} parent=1 // loop_footer_branch
      %11 = sbr.rel target = $region3
    $region8: #{tpu_custom_call.1} parent=1 // loop_exit
      _
    %850 = vsyncpa [#allocation3], 1
    %s851 = scalar_lea.sflag [#allocation3], 1
    %852 = vsyncpa %s851, 1

</llo_original>
